<compile_context>
chip_gen: v7x
topology: tpu7x:2x2x1
jax: 0.10.0
libtpu: 0.0.40
codegen_flags: <defaults>
</compile_context>

<pallas_src>
import jax
import jax.numpy as jnp
from jax import lax
from jax.experimental import pallas as pl
from jax.experimental.pallas import tpu as pltpu

_LANE_CHUNK = 512     # in-kernel compute width (lanes); multiple of 128
_TB_MAX = 32768       # max batch-lane tile streamed per grid step


def _carbon_mlp_kernel(x_ref, w1_ref, b1_ref, w2_ref, b2_ref, w3_ref, b3_ref,
                       o_ref):
    # Weight/bias loads hoisted out of the chunk loop (tiny, VMEM-resident).
    w1 = w1_ref[...]          # (32, F)
    b1 = b1_ref[...]          # (32, 1)
    w2 = w2_ref[...]          # (16, 32)
    b2 = b2_ref[...]          # (16, 1)
    w3 = w3_ref[...]          # (16, 1)
    b3 = b3_ref[...]          # (1, 1)

    n_chunks = x_ref.shape[1] // _LANE_CHUNK   # static

    def body(c, carry):
        col = pl.multiple_of(c * _LANE_CHUNK, _LANE_CHUNK)
        x = x_ref[:, pl.ds(col, _LANE_CHUNK)]                 # (F, 512)
        # layer1 + ReLU: (32, F) @ (F, 512) -> (32, 512)
        h1 = jnp.dot(w1, x, preferred_element_type=jnp.float32)
        h1 = jnp.maximum(h1 + b1, 0.0)
        # dropout(p=0.2): identity at inference (PyTorch eval() semantics)
        # TODO(synk): training-mode dropout (pltpu.prng_random_bits mask) not implemented.
        # layer2 + ReLU: (16, 32) @ (32, 512) -> (16, 512)
        h2 = jnp.dot(w2, h1, preferred_element_type=jnp.float32)
        h2 = jnp.maximum(h2 + b2, 0.0)
        # layer3 (16 -> 1): broadcast-multiply + cross-sublane reduce
        out = jnp.sum(h2 * w3, axis=0, keepdims=True) + b3     # (1, 512)
        o_ref[:, pl.ds(col, _LANE_CHUNK)] = out.astype(o_ref.dtype)
        return carry

    lax.fori_loop(0, n_chunks, body, 0, unroll=(n_chunks <= 8))


def _tile_plan(batch, *, chunk=_LANE_CHUNK, tb_max=_TB_MAX):
    """Adaptive, tight batch tiling: tb multiple of `chunk`, <= tb_max."""
    b_pad = pl.cdiv(batch, chunk) * chunk
    n_steps = pl.cdiv(b_pad, tb_max)
    tb = pl.cdiv(b_pad, n_steps * chunk) * chunk
    b_pad = n_steps * tb
    return b_pad, tb, n_steps


def carbon_footprint_nn_feature_major(x_fm, params):
    """Fused MLP on feature-major input. x_fm: (input_dim, B) f32 -> (B, 1)."""
    w1, b1, w2, b2, w3, b3 = params
    F, B = x_fm.shape
    b_pad, tb, n_steps = _tile_plan(B)

    x_p = x_fm if b_pad == B else jnp.pad(x_fm, ((0, 0), (0, b_pad - B)))

    # Weights/biases stay VMEM-resident across all grid steps.
    def resident(a):
        return pl.BlockSpec(a.shape, lambda i: (0,) * a.ndim)

    n_param_elems = sum(p.size for p in params)
    cost = pl.CostEstimate(
        flops=2 * b_pad * (F * 32 + 32 * 16 + 16),
        transcendentals=0,
        bytes_accessed=4 * (b_pad * (F + 1) + n_param_elems),
    )

    out_fm = pl.pallas_call(
        _carbon_mlp_kernel,
        out_shape=jax.ShapeDtypeStruct((1, b_pad), jnp.float32),
        grid=(n_steps,),
        in_specs=[
            pl.BlockSpec((F, tb), lambda i: (0, i)),        # stream x tiles
            resident(w1), resident(b1),
            resident(w2), resident(b2),
            resident(w3), resident(b3),
        ],
        out_specs=pl.BlockSpec((1, tb), lambda i: (0, i)),  # stream out tiles
        compiler_params=pltpu.CompilerParams(
            dimension_semantics=("parallel",),
            vmem_limit_bytes=32 * 1024 * 1024,
        ),
        cost_estimate=cost,
    )(x_p, w1, b1, w2, b2, w3, b3)

    return out_fm[:, :B].T                                  # (B, 1)


def carbon_footprint_nn(x, params):
    """PyTorch-layout entry point. x: (B, input_dim) f32 -> (B, 1).

    Note: the transpose to feature-major costs ~1.6x the kernel's own HBM
    traffic; prefer producing feature-major data upstream and calling
    carbon_footprint_nn_feature_major directly.
    """
    return carbon_footprint_nn_feature_major(x.T, params)


def init_params(key, input_dim):
    """Deterministic init mimicking PyTorch Linear default U(-1/sqrt(fan_in), +).

    Weights are stored (out, in) and biases (out, 1) for the batch-on-lanes
    kernel layout; w3 is kept as (16, 1) for the broadcast-reduce in layer3.
    """
    def linear(key, fan_in, fan_out):
        kw, kb = jax.random.split(key)
        bound = 1.0 / jnp.sqrt(fan_in)
        w = jax.random.uniform(kw, (fan_out, fan_in), jnp.float32, -bound, bound)
        b = jax.random.uniform(kb, (fan_out, 1), jnp.float32, -bound, bound)
        return w, b

    k1, k2, k3 = jax.random.split(key, 3)
    w1, b1 = linear(k1, input_dim, 32)        # (32, F),  (32, 1)
    w2, b2 = linear(k2, 32, 16)               # (16, 32), (16, 1)
    w3_row, b3 = linear(k3, 16, 1)            # (1, 16),  (1, 1)
    w3 = w3_row.T                             # (16, 1)
    return w1, b1, w2, b2, w3, b3


def reference_forward(x, params):
    w1, b1, w2, b2, w3, b3 = params
    h = jnp.maximum(x @ w1.T + b1.T, 0.0)
    h = jnp.maximum(h @ w2.T + b2.T, 0.0)
    return h @ w3 + b3                        # w3: (16, 1), b3: (1, 1)


if __name__ == "__main__":
    key = jax.random.PRNGKey(0)
    k_x, k_p = jax.random.split(key)

    input_dim = 4          # ['traffic_condition', 'trip_duration',
                           #  'distance_km', 'fuel_efficiency_l_per_100km']
    batch = 8

    x = jax.random.normal(k_x, (batch, input_dim), dtype=jnp.float32)
    params = init_params(k_p, input_dim)

    # PyTorch-layout path (includes the transpose).
    out = carbon_footprint_nn(x, params)
    out = jax.block_until_ready(out)

    # Feature-major fast path (no wrapper-side transpose pass).
    out_fm = carbon_footprint_nn_feature_major(jnp.asarray(x.T), params)
    out_fm = jax.block_until_ready(out_fm)

    ref = reference_forward(x, params)
    assert out.shape == (batch, 1)
    assert jnp.allclose(out, ref, atol=1e-5, rtol=1e-5)
    assert jnp.allclose(out_fm, ref, atol=1e-5, rtol=1e-5)

    print("KERNEL_OK")
</pallas_src>

<mosaic_0001>
module attributes {stable_mosaic.version = 11 : i64} {
  func.func @_carbon_mlp_kernel(%arg0: i32, %arg1: memref<4x512xf32, #tpu.memory_space<vmem>>, %arg2: memref<32x4xf32, #tpu.memory_space<vmem>>, %arg3: memref<32x1xf32, #tpu.memory_space<vmem>>, %arg4: memref<16x32xf32, #tpu.memory_space<vmem>>, %arg5: memref<16x1xf32, #tpu.memory_space<vmem>>, %arg6: memref<16x1xf32, #tpu.memory_space<vmem>>, %arg7: memref<1x1xf32, #tpu.memory_space<vmem>>, %arg8: memref<1x512xf32, #tpu.memory_space<vmem>>) attributes {dimension_semantics = [#tpu.dimension_semantics<parallel>], iteration_bounds = array<i64: 1>, scalar_prefetch = 0 : i64, scratch_operands = 0 : i64, tpu.core_type = #tpu.core_type<tc>, window_params = [{transform_indices = @transform_0, window_bounds = array<i64: 4, 512>}, {pipeline_mode = #tpu.pipeline_mode<synchronous>, transform_indices = @transform_1, window_bounds = array<i64: 32, 4>}, {pipeline_mode = #tpu.pipeline_mode<synchronous>, transform_indices = @transform_2, window_bounds = array<i64: 32, 1>}, {pipeline_mode = #tpu.pipeline_mode<synchronous>, transform_indices = @transform_3, window_bounds = array<i64: 16, 32>}, {pipeline_mode = #tpu.pipeline_mode<synchronous>, transform_indices = @transform_4, window_bounds = array<i64: 16, 1>}, {pipeline_mode = #tpu.pipeline_mode<synchronous>, transform_indices = @transform_5, window_bounds = array<i64: 16, 1>}, {pipeline_mode = #tpu.pipeline_mode<synchronous>, transform_indices = @transform_6, window_bounds = array<i64: 1, 1>}, {transform_indices = @transform_7, window_bounds = array<i64: 1, 512>}]} {
    %c0 = arith.constant 0 : index
    %c0_0 = arith.constant 0 : index
    %0 = vector.load %arg2[%c0, %c0_0] : memref<32x4xf32, #tpu.memory_space<vmem>>, vector<32x4xf32>
    %c0_1 = arith.constant 0 : index
    %c0_2 = arith.constant 0 : index
    %1 = vector.load %arg3[%c0_1, %c0_2] : memref<32x1xf32, #tpu.memory_space<vmem>>, vector<32x1xf32>
    %c0_3 = arith.constant 0 : index
    %c0_4 = arith.constant 0 : index
    %2 = vector.load %arg4[%c0_3, %c0_4] : memref<16x32xf32, #tpu.memory_space<vmem>>, vector<16x32xf32>
    %c0_5 = arith.constant 0 : index
    %c0_6 = arith.constant 0 : index
    %3 = vector.load %arg5[%c0_5, %c0_6] : memref<16x1xf32, #tpu.memory_space<vmem>>, vector<16x1xf32>
    %c0_7 = arith.constant 0 : index
    %c0_8 = arith.constant 0 : index
    %4 = vector.load %arg6[%c0_7, %c0_8] : memref<16x1xf32, #tpu.memory_space<vmem>>, vector<16x1xf32>
    %c0_9 = arith.constant 0 : index
    %c0_10 = arith.constant 0 : index
    %5 = vector.load %arg7[%c0_9, %c0_10] : memref<1x1xf32, #tpu.memory_space<vmem>>, vector<1x1xf32>
    %c0_i32 = arith.constant 0 : i32
    %c512_i32 = arith.constant 512 : i32
    %6 = arith.muli %c0_i32, %c512_i32 : i32
    %7 = tpu.assume_multiple %6, 512 : i32
    %c0_11 = arith.constant 0 : index
    %8 = arith.index_cast %7 : i32 to index
    %9 = vector.load %arg1[%c0_11, %8] : memref<4x512xf32, #tpu.memory_space<vmem>>, vector<4x512xf32>
    %cst = arith.constant dense<0.000000e+00> : vector<32x512xf32>
    %10 = tpu.matmul %0, %9, %cst {dimension_numbers = #tpu.dot_dimension_numbers<[1], [0], [0], [1], [0, 0, 1, 1], [], []>} : vector<32x4xf32>, vector<4x512xf32>, vector<32x512xf32> -> vector<32x512xf32>
    %11 = vector.broadcast %1 : vector<32x1xf32> to vector<32x512xf32>
    %12 = arith.addf %10, %11 : vector<32x512xf32>
    %cst_12 = arith.constant 0.000000e+00 : f32
    %13 = vector.broadcast %cst_12 : f32 to vector<32x512xf32>
    %14 = arith.maximumf %12, %13 : vector<32x512xf32>
    %cst_13 = arith.constant dense<0.000000e+00> : vector<16x512xf32>
    %15 = tpu.matmul %2, %14, %cst_13 {dimension_numbers = #tpu.dot_dimension_numbers<[1], [0], [0], [1], [0, 0, 1, 1], [], []>} : vector<16x32xf32>, vector<32x512xf32>, vector<16x512xf32> -> vector<16x512xf32>
    %16 = vector.broadcast %3 : vector<16x1xf32> to vector<16x512xf32>
    %17 = arith.addf %15, %16 : vector<16x512xf32>
    %cst_14 = arith.constant 0.000000e+00 : f32
    %18 = vector.broadcast %cst_14 : f32 to vector<16x512xf32>
    %19 = arith.maximumf %17, %18 : vector<16x512xf32>
    %20 = vector.broadcast %4 : vector<16x1xf32> to vector<16x512xf32>
    %21 = arith.mulf %19, %20 : vector<16x512xf32>
    %cst_15 = arith.constant dense<0.000000e+00> : vector<512xf32>
    %22 = vector.multi_reduction <add>, %21, %cst_15 [0] : vector<16x512xf32> to vector<512xf32>
    %23 = vector.shape_cast %22 : vector<512xf32> to vector<1x512xf32>
    %24 = vector.broadcast %5 : vector<1x1xf32> to vector<1x512xf32>
    %25 = arith.addf %23, %24 : vector<1x512xf32>
    %c0_16 = arith.constant 0 : index
    %26 = arith.index_cast %7 : i32 to index
    %27 = vector.load %arg8[%c0_16, %26] : memref<1x512xf32, #tpu.memory_space<vmem>>, vector<1x512xf32>
    tpu.vector_store %arg8[%c0_16, %26], %25 {strides = array<i32>} : memref<1x512xf32, #tpu.memory_space<vmem>>, vector<1x512xf32>,
    %c1_i32 = arith.constant 1 : i32
    return
  }
  func.func @transform_0(%arg0: i32) -> (i32, i32) {
    %c0_i32 = arith.constant 0 : i32
    %c0_i32_0 = arith.constant 0 : i32
    return %c0_i32, %arg0 : i32, i32
  }
  func.func @transform_1(%arg0: i32) -> (i32, i32) {
    %c0_i32 = arith.constant 0 : i32
    %c0_i32_0 = arith.constant 0 : i32
    %c0_i32_1 = arith.constant 0 : i32
    return %c0_i32, %c0_i32_0 : i32, i32
  }
  func.func @transform_2(%arg0: i32) -> (i32, i32) {
    %c0_i32 = arith.constant 0 : i32
    %c0_i32_0 = arith.constant 0 : i32
    %c0_i32_1 = arith.constant 0 : i32
    return %c0_i32, %c0_i32_0 : i32, i32
  }
  func.func @transform_3(%arg0: i32) -> (i32, i32) {
    %c0_i32 = arith.constant 0 : i32
    %c0_i32_0 = arith.constant 0 : i32
    %c0_i32_1 = arith.constant 0 : i32
    return %c0_i32, %c0_i32_0 : i32, i32
  }
  func.func @transform_4(%arg0: i32) -> (i32, i32) {
    %c0_i32 = arith.constant 0 : i32
    %c0_i32_0 = arith.constant 0 : i32
    %c0_i32_1 = arith.constant 0 : i32
    return %c0_i32, %c0_i32_0 : i32, i32
  }
  func.func @transform_5(%arg0: i32) -> (i32, i32) {
    %c0_i32 = arith.constant 0 : i32
    %c0_i32_0 = arith.constant 0 : i32
    %c0_i32_1 = arith.constant 0 : i32
    return %c0_i32, %c0_i32_0 : i32, i32
  }
  func.func @transform_6(%arg0: i32) -> (i32, i32) {
    %c0_i32 = arith.constant 0 : i32
    %c0_i32_0 = arith.constant 0 : i32
    %c0_i32_1 = arith.constant 0 : i32
    return %c0_i32, %c0_i32_0 : i32, i32
  }
  func.func @transform_7(%arg0: i32) -> (i32, i32) {
    %c0_i32 = arith.constant 0 : i32
    %c0_i32_0 = arith.constant 0 : i32
    return %c0_i32, %arg0 : i32, i32
  }
}

</mosaic_0001>

<llo_original>
// kernel: tpu_custom_call.1
$region0: #{tpu_custom_call.1}
  #allocation0 [shape = 'u32[]', space=smem, size = 0x4, offset = 0x4, fixed_abs, tag = 'smem constant byte address 0x4 - core index']
  #allocation1 [shape = 'u32[144,128]{1,0:T(1,128)}', space=vmem, size = 0x12000, scoped, tag = 'internal scratch']
  #allocation2 [shape = 'f32[1,1]{1,0:T(1,128)S(1)}', space=vmem, size = 0x200, scoped, tag = 'scoped memory for tpu_custom_call.1']
  %s0 = inlined_call_operand.vmem [shape: f32[4,512], index: 0, kind: input, shape index: {}]
  %s1 = inlined_call_operand.vmem [shape: f32[32,4], index: 1, kind: input, shape index: {}]
  %s2 = inlined_call_operand.vmem [shape: f32[32,1], index: 2, kind: input, shape index: {}]
  %s3 = inlined_call_operand.vmem [shape: f32[16,32], index: 3, kind: input, shape index: {}]
  %s4 = inlined_call_operand.vmem [shape: f32[16,1], index: 4, kind: input, shape index: {}]
  %s5 = inlined_call_operand.vmem [shape: f32[16,1], index: 5, kind: input, shape index: {}]
  %s6 = inlined_call_operand.<no memory space> [shape: f32[1,1], index: 6, kind: input, shape index: {}]
  %s7 = inlined_call_operand.hbm [shape: f32[1,512], index: 7, kind: output, shape index: {}]
  %s8 = sld [smem:[#allocation0]]
  $region38: #{tpu_custom_call.1} parent=0
    _
  %s10 = ssub.s32 1, %s8
  %s11 = scalar_select 0, %s10, %s8
  %v12 = vstv %s6
  %13 = vst [vmem:[#allocation2] sm:$0x1] %v12
  $region1: #{tpu_custom_call.1} parent=0
    #allocation3 [shape = 'u8[2048]{0}', space=vmem, size = 0x800, scoped, tag = 'output window, operand 0, single buffered']
    #allocation4 [shape = 's32[1]{0}', space=sflag, size = 0x4, scoped, tag = 'scoped memory for tpu_custom_call.1']
    %14 = vsyncpa [#allocation4], 0
    // Predicated region
    $region2: #{tpu_custom_call.1} parent=1 // pred_check
      _
    $region3: #{tpu_custom_call.1} parent=1 // pred_check_branch
      %16 = sbr.rel (0) target = $region5
    $region4: #{tpu_custom_call.1} parent=1 // pred_region
      _
    $region5: #{tpu_custom_call.1} parent=1 // pred_fallthru
      _
    // Predicated region
    $region6: #{tpu_custom_call.1} parent=1 // pred_check
      _
    $region7: #{tpu_custom_call.1} parent=1 // pred_check_branch
      %18 = sbr.rel (0) target = $region9
    $region8: #{tpu_custom_call.1} parent=1 // pred_region
      _
    $region9: #{tpu_custom_call.1} parent=1 // pred_fallthru
      _
    // Predicated region
    $region10: #{tpu_custom_call.1} parent=1 // pred_check
      _
    $region11: #{tpu_custom_call.1} parent=1 // pred_check_branch
      %20 = sbr.rel (0) target = $region13
    $region12: #{tpu_custom_call.1} parent=1 // pred_region
      _
    $region13: #{tpu_custom_call.1} parent=1 // pred_fallthru
      _
    // Predicated region
    $region14: #{tpu_custom_call.1} parent=1 // pred_check
      _
    $region15: #{tpu_custom_call.1} parent=1 // pred_check_branch
      %22 = sbr.rel (0) target = $region17
    $region16: #{tpu_custom_call.1} parent=1 // pred_region
      _
    $region17: #{tpu_custom_call.1} parent=1 // pred_fallthru
      _
    // Predicated region
    $region18: #{tpu_custom_call.1} parent=1 // pred_check
      _
    $region19: #{tpu_custom_call.1} parent=1 // pred_check_branch
      %24 = sbr.rel (0) target = $region21
    $region20: #{tpu_custom_call.1} parent=1 // pred_region
      _
    $region21: #{tpu_custom_call.1} parent=1 // pred_fallthru
      _
    // Predicated region
    $region22: #{tpu_custom_call.1} parent=1 // pred_check
      _
    $region23: #{tpu_custom_call.1} parent=1 // pred_check_branch
      %26 = sbr.rel (0) target = $region25
    $region24: #{tpu_custom_call.1} parent=1 // pred_region
      _
    $region25: #{tpu_custom_call.1} parent=1 // pred_fallthru
      _
    // Predicated region
    $region26: #{tpu_custom_call.1} parent=1 // pred_check
      _
    $region27: #{tpu_custom_call.1} parent=1 // pred_check_branch
      %28 = sbr.rel (0) target = $region29
    $region28: #{tpu_custom_call.1} parent=1 // pred_region
      _
    $region29: #{tpu_custom_call.1} parent=1 // pred_fallthru
      _
    %v29 = vld [vmem:[%s1] sm:$0xff]
    %v30 = vld [vmem:[%s1 + $0x8] sm:$0xff]
    %v31 = vld [vmem:[%s1 + $0x10] sm:$0xff]
    %v32 = vld [vmem:[%s1 + $0x18] sm:$0xff]
    %v33 = vld [vmem:[%s2] sm:$0xff]
    %v34 = vld [vmem:[%s2 + $0x8] sm:$0xff]
    %v35 = vld [vmem:[%s2 + $0x10] sm:$0xff]
    %v36 = vld [vmem:[%s2 + $0x18] sm:$0xff]
    %v37 = vld [vmem:[%s3] sm:$0xff]
    %v38 = vld [vmem:[%s3 + $0x8] sm:$0xff]
    %v39 = vld [vmem:[%s4] sm:$0xff]
    %v40 = vld [vmem:[%s4 + $0x8] sm:$0xff]
    %v41 = vld [vmem:[%s5] sm:$0xff]
    %v42 = vld [vmem:[%s5 + $0x8] sm:$0xff]
    %v43 = vld [vmem:[#allocation2] sm:$0x1]
    %v44 = vld [vmem:[%s0] sm:$0xff]
    %v45 = vld [vmem:[%s0 + $0x8] sm:$0xff]
    %47 = vset.pattern.permute.xlu0 0
    %48 = vperm.xlu0 %47, %v33
    %v49 = vpop.permute.xlu0 %48
    %52 = vset.pattern.permute.xlu0 0
    %53 = vperm.xlu0 %52, %v34
    %v54 = vpop.permute.xlu0 %53
    %57 = vset.pattern.permute.xlu0 0
    %58 = vperm.xlu0 %57, %v35
    %v59 = vpop.permute.xlu0 %58
    %62 = vset.pattern.permute.xlu0 0
    %63 = vperm.xlu0 %62, %v36
    %v64 = vpop.permute.xlu0 %63
    %v68 = vcombine.high %v44, %v44
    %v69 = vcombine.high %v45, %v45
    %vm70 = vcmask 31744
    %v72 = vsel %vm70, %v29, 0
    %v75 = vsel %vm70, %v30, 0
    %v78 = vsel %vm70, %v31, 0
    %v81 = vsel %vm70, %v32, 0
    %vm83 = vcmask 1043456
    %v84 = vsel %vm83, %v44, 0
    %v86 = vsel %vm83, %v68, 0
    %v88 = vsel %vm83, %v45, 0
    %v90 = vsel %vm83, %v69, 0
    %92 = vmatprep.subr.mxu0 %v86
    %93 = vmatpush1.msra.mxu0 %v84
    %94 = vmatprep.subr.mxu0 0.0
    %95 = vmatpush1.msra.mxu0 0.0
    %96 = vmatprep.subr.mxu0 0.0
    %97 = vmatpush1.msra.mxu0 0.0
    %98 = vmatprep.subr.mxu0 0.0
    %99 = vmatpush1.msra.mxu0 0.0
    %100 = vmatprep.subr.mxu0 0.0
    %101 = vmatpush1.msra.mxu0 0.0
    %102 = vmatprep.subr.mxu0 0.0
    %103 = vmatpush1.msra.mxu0 0.0
    %104 = vmatprep.subr.mxu0 0.0
    %105 = vmatpush1.msra.mxu0 0.0
    %106 = vmatprep.subr.mxu0 0.0
    %107 = vmatpush1.msra.mxu0 0.0
    %108 = vmatprep.subr.mxu0 0.0
    %109 = vmatpush1.msra.mxu0 0.0
    %110 = vmatprep.subr.mxu0 0.0
    %111 = vmatpush1.msra.mxu0 0.0
    %112 = vmatprep.subr.mxu0 0.0
    %113 = vmatpush1.msra.mxu0 0.0
    %114 = vmatprep.subr.mxu0 0.0
    %115 = vmatpush1.msra.mxu0 0.0
    %116 = vmatprep.subr.mxu0 0.0
    %117 = vmatpush1.msra.mxu0 0.0
    %118 = vmatprep.subr.mxu0 0.0
    %119 = vmatpush1.msra.mxu0 0.0
    %120 = vmatprep.subr.mxu0 0.0
    %121 = vmatpush1.msra.mxu0 0.0
    %122 = vmatprep.subr.mxu0 0.0
    %123 = vmatpush1.msra.mxu0 0.0
    %124 = vmatprep.subr.mxu0 0.0
    %125 = vmatpush1.msra.mxu0 0.0
    %126 = vmatprep.subr.mxu0 0.0
    %127 = vmatpush1.msra.mxu0 0.0
    %128 = vmatprep.subr.mxu0 0.0
    %129 = vmatpush1.msra.mxu0 0.0
    %130 = vmatprep.subr.mxu0 0.0
    %131 = vmatpush1.msra.mxu0 0.0
    %132 = vmatprep.subr.mxu0 0.0
    %133 = vmatpush1.msra.mxu0 0.0
    %134 = vmatprep.subr.mxu0 0.0
    %135 = vmatpush1.msra.mxu0 0.0
    %136 = vmatprep.subr.mxu0 0.0
    %137 = vmatpush1.msra.mxu0 0.0
    %138 = vmatprep.subr.mxu0 0.0
    %139 = vmatpush1.msra.mxu0 0.0
    %140 = vmatprep.subr.mxu0 0.0
    %141 = vmatpush1.msra.mxu0 0.0
    %142 = vmatprep.subr.mxu0 0.0
    %143 = vmatpush1.msra.mxu0 0.0
    %144 = vmatprep.subr.mxu0 0.0
    %145 = vmatpush1.msra.mxu0 0.0
    %146 = vmatprep.subr.mxu0 0.0
    %147 = vmatpush1.msra.mxu0 0.0
    %148 = vmatprep.subr.mxu0 0.0
    %149 = vmatpush1.msra.mxu0 0.0
    %150 = vmatprep.subr.mxu0 0.0
    %151 = vmatpush1.msra.mxu0 0.0
    %152 = vmatprep.subr.mxu0 0.0
    %153 = vmatpush1.msra.mxu0 0.0
    %154 = vmatprep.subr.mxu0 0.0
    %155 = vmatpush1.msra.mxu0 0.0
    %156 = vmatprep.mubr.f32.mxu0 0.0
    %157 = vmatmul.mubr.f32.gmra.mrb[0].mxu0 %v72
    %v158 = vpop.f32.mrb[0].mxu0
    %v159 = vadd.f32 %v49, %v158
    %v160 = vpop.f32.mrb[0].mxu0
    %v161 = vadd.f32 %v49, %v160
    %162 = vmatprep.mubr.f32.mxu0 0.0
    %163 = vmatmul.mubr.f32.gmra.mrb[0].mxu0 %v75
    %v164 = vpop.f32.mrb[0].mxu0
    %v165 = vadd.f32 %v54, %v164
    %v166 = vpop.f32.mrb[0].mxu0
    %v167 = vadd.f32 %v54, %v166
    %168 = vmatprep.mubr.f32.mxu0 0.0
    %169 = vmatmul.mubr.f32.gmra.mrb[0].mxu0 %v78
    %v170 = vpop.f32.mrb[0].mxu0
    %v171 = vadd.f32 %v59, %v170
    %v172 = vpop.f32.mrb[0].mxu0
    %v173 = vadd.f32 %v59, %v172
    %174 = vmatprep.mubr.f32.mxu0 0.0
    %175 = vmatmul.mubr.f32.gmra.mrb[0].mxu0 %v81
    %v176 = vpop.f32.mrb[0].mxu0
    %v177 = vadd.f32 %v64, %v176
    %v178 = vpop.f32.mrb[0].mxu0
    %v179 = vadd.f32 %v64, %v178
    %180 = vdwg.mxu0
    %181 = vmatprep.subr.mxu0 %v90
    %182 = vmatpush1.msra.mxu0 %v88
    %183 = vmatprep.subr.mxu0 0.0
    %184 = vmatpush1.msra.mxu0 0.0
    %185 = vmatprep.subr.mxu0 0.0
    %186 = vmatpush1.msra.mxu0 0.0
    %187 = vmatprep.subr.mxu0 0.0
    %188 = vmatpush1.msra.mxu0 0.0
    %189 = vmatprep.subr.mxu0 0.0
    %190 = vmatpush1.msra.mxu0 0.0
    %191 = vmatprep.subr.mxu0 0.0
    %192 = vmatpush1.msra.mxu0 0.0
    %193 = vmatprep.subr.mxu0 0.0
    %194 = vmatpush1.msra.mxu0 0.0
    %195 = vmatprep.subr.mxu0 0.0
    %196 = vmatpush1.msra.mxu0 0.0
    %197 = vmatprep.subr.mxu0 0.0
    %198 = vmatpush1.msra.mxu0 0.0
    %199 = vmatprep.subr.mxu0 0.0
    %200 = vmatpush1.msra.mxu0 0.0
    %201 = vmatprep.subr.mxu0 0.0
    %202 = vmatpush1.msra.mxu0 0.0
    %203 = vmatprep.subr.mxu0 0.0
    %204 = vmatpush1.msra.mxu0 0.0
    %205 = vmatprep.subr.mxu0 0.0
    %206 = vmatpush1.msra.mxu0 0.0
    %207 = vmatprep.subr.mxu0 0.0
    %208 = vmatpush1.msra.mxu0 0.0
    %209 = vmatprep.subr.mxu0 0.0
    %210 = vmatpush1.msra.mxu0 0.0
    %211 = vmatprep.subr.mxu0 0.0
    %212 = vmatpush1.msra.mxu0 0.0
    %213 = vmatprep.subr.mxu0 0.0
    %214 = vmatpush1.msra.mxu0 0.0
    %215 = vmatprep.subr.mxu0 0.0
    %216 = vmatpush1.msra.mxu0 0.0
    %217 = vmatprep.subr.mxu0 0.0
    %218 = vmatpush1.msra.mxu0 0.0
    %219 = vmatprep.subr.mxu0 0.0
    %220 = vmatpush1.msra.mxu0 0.0
    %221 = vmatprep.subr.mxu0 0.0
    %222 = vmatpush1.msra.mxu0 0.0
    %223 = vmatprep.subr.mxu0 0.0
    %224 = vmatpush1.msra.mxu0 0.0
    %225 = vmatprep.subr.mxu0 0.0
    %226 = vmatpush1.msra.mxu0 0.0
    %227 = vmatprep.subr.mxu0 0.0
    %228 = vmatpush1.msra.mxu0 0.0
    %229 = vmatprep.subr.mxu0 0.0
    %230 = vmatpush1.msra.mxu0 0.0
    %231 = vmatprep.subr.mxu0 0.0
    %232 = vmatpush1.msra.mxu0 0.0
    %233 = vmatprep.subr.mxu0 0.0
    %234 = vmatpush1.msra.mxu0 0.0
    %235 = vmatprep.subr.mxu0 0.0
    %236 = vmatpush1.msra.mxu0 0.0
    %237 = vmatprep.subr.mxu0 0.0
    %238 = vmatpush1.msra.mxu0 0.0
    %239 = vmatprep.subr.mxu0 0.0
    %240 = vmatpush1.msra.mxu0 0.0
    %241 = vmatprep.subr.mxu0 0.0
    %242 = vmatpush1.msra.mxu0 0.0
    %243 = vmatprep.subr.mxu0 0.0
    %244 = vmatpush1.msra.mxu0 0.0
    %245 = vmatprep.mubr.f32.mxu0 0.0
    %246 = vmatmul.mubr.f32.gmra.mrb[0].mxu0 %v72
    %v247 = vpop.f32.mrb[0].mxu0
    %v248 = vadd.f32 %v49, %v247
    %v249 = vpop.f32.mrb[0].mxu0
    %v250 = vadd.f32 %v49, %v249
    %251 = vmatprep.mubr.f32.mxu0 0.0
    %252 = vmatmul.mubr.f32.gmra.mrb[0].mxu0 %v75
    %v253 = vpop.f32.mrb[0].mxu0
    %v254 = vadd.f32 %v54, %v253
    %v255 = vpop.f32.mrb[0].mxu0
    %v256 = vadd.f32 %v54, %v255
    %257 = vmatprep.mubr.f32.mxu0 0.0
    %258 = vmatmul.mubr.f32.gmra.mrb[0].mxu0 %v78
    %v259 = vpop.f32.mrb[0].mxu0
    %v260 = vadd.f32 %v59, %v259
    %v261 = vpop.f32.mrb[0].mxu0
    %v262 = vadd.f32 %v59, %v261
    %263 = vmatprep.mubr.f32.mxu0 0.0
    %264 = vmatmul.mubr.f32.gmra.mrb[0].mxu0 %v81
    %v265 = vpop.f32.mrb[0].mxu0
    %v266 = vadd.f32 %v64, %v265
    %v267 = vpop.f32.mrb[0].mxu0
    %v268 = vadd.f32 %v64, %v267
    %269 = vdwg.mxu0
    %v270 = vmax.f32 %v159, 0.0
    %v271 = vmax.f32 %v161, 0.0
    %v272 = vmax.f32 %v248, 0.0
    %v273 = vmax.f32 %v250, 0.0
    %v274 = vmax.f32 %v165, 0.0
    %v275 = vmax.f32 %v167, 0.0
    %v276 = vmax.f32 %v254, 0.0
    %v277 = vmax.f32 %v256, 0.0
    %v278 = vmax.f32 %v171, 0.0
    %v279 = vmax.f32 %v173, 0.0
    %v280 = vmax.f32 %v260, 0.0
    %v281 = vmax.f32 %v262, 0.0
    %v282 = vmax.f32 %v177, 0.0
    %v283 = vmax.f32 %v179, 0.0
    %v284 = vmax.f32 %v266, 0.0
    %v285 = vmax.f32 %v268, 0.0
    %287 = vset.pattern.permute.xlu0 0
    %288 = vperm.xlu0 %287, %v39
    %v289 = vpop.permute.xlu0 %288
    %292 = vset.pattern.permute.xlu0 0
    %293 = vperm.xlu0 %292, %v40
    %v294 = vpop.permute.xlu0 %293
    %vm296 = vcmask 261120
    %v298 = vsel %vm296, %v37, 0
    %v301 = vsel %vm296, %v38, 0
    %303 = vmatprep.subr.mxu0 %v271
    %304 = vmatpush1.msra.mxu0 %v270
    %305 = vmatprep.subr.mxu0 %v275
    %306 = vmatpush1.msra.mxu0 %v274
    %307 = vmatprep.subr.mxu0 %v279
    %308 = vmatpush1.msra.mxu0 %v278
    %309 = vmatprep.subr.mxu0 %v283
    %310 = vmatpush1.msra.mxu0 %v282
    %311 = vmatprep.subr.mxu0 0.0
    %312 = vmatpush1.msra.mxu0 0.0
    %313 = vmatprep.subr.mxu0 0.0
    %314 = vmatpush1.msra.mxu0 0.0
    %315 = vmatprep.subr.mxu0 0.0
    %316 = vmatpush1.msra.mxu0 0.0
    %317 = vmatprep.subr.mxu0 0.0
    %318 = vmatpush1.msra.mxu0 0.0
    %319 = vmatprep.subr.mxu0 0.0
    %320 = vmatpush1.msra.mxu0 0.0
    %321 = vmatprep.subr.mxu0 0.0
    %322 = vmatpush1.msra.mxu0 0.0
    %323 = vmatprep.subr.mxu0 0.0
    %324 = vmatpush1.msra.mxu0 0.0
    %325 = vmatprep.subr.mxu0 0.0
    %326 = vmatpush1.msra.mxu0 0.0
    %327 = vmatprep.subr.mxu0 0.0
    %328 = vmatpush1.msra.mxu0 0.0
    %329 = vmatprep.subr.mxu0 0.0
    %330 = vmatpush1.msra.mxu0 0.0
    %331 = vmatprep.subr.mxu0 0.0
    %332 = vmatpush1.msra.mxu0 0.0
    %333 = vmatprep.subr.mxu0 0.0
    %334 = vmatpush1.msra.mxu0 0.0
    %335 = vmatprep.subr.mxu0 0.0
    %336 = vmatpush1.msra.mxu0 0.0
    %337 = vmatprep.subr.mxu0 0.0
    %338 = vmatpush1.msra.mxu0 0.0
    %339 = vmatprep.subr.mxu0 0.0
    %340 = vmatpush1.msra.mxu0 0.0
    %341 = vmatprep.subr.mxu0 0.0
    %342 = vmatpush1.msra.mxu0 0.0
    %343 = vmatprep.subr.mxu0 0.0
    %344 = vmatpush1.msra.mxu0 0.0
    %345 = vmatprep.subr.mxu0 0.0
    %346 = vmatpush1.msra.mxu0 0.0
    %347 = vmatprep.subr.mxu0 0.0
    %348 = vmatpush1.msra.mxu0 0.0
    %349 = vmatprep.subr.mxu0 0.0
    %350 = vmatpush1.msra.mxu0 0.0
    %351 = vmatprep.subr.mxu0 0.0
    %352 = vmatpush1.msra.mxu0 0.0
    %353 = vmatprep.subr.mxu0 0.0
    %354 = vmatpush1.msra.mxu0 0.0
    %355 = vmatprep.subr.mxu0 0.0
    %356 = vmatpush1.msra.mxu0 0.0
    %357 = vmatprep.subr.mxu0 0.0
    %358 = vmatpush1.msra.mxu0 0.0
    %359 = vmatprep.subr.mxu0 0.0
    %360 = vmatpush1.msra.mxu0 0.0
    %361 = vmatprep.subr.mxu0 0.0
    %362 = vmatpush1.msra.mxu0 0.0
    %363 = vmatprep.subr.mxu0 0.0
    %364 = vmatpush1.msra.mxu0 0.0
    %365 = vmatprep.subr.mxu0 0.0
    %366 = vmatpush1.msra.mxu0 0.0
    %367 = vmatprep.mubr.f32.mxu0 0.0
    %368 = vmatmul.mubr.f32.gmra.mrb[0].mxu0 %v298
    %v369 = vpop.f32.mrb[0].mxu0
    %v370 = vadd.f32 %v289, %v369
    %v371 = vpop.f32.mrb[0].mxu0
    %v372 = vadd.f32 %v289, %v371
    %373 = vmatprep.mubr.f32.mxu0 0.0
    %374 = vmatmul.mubr.f32.gmra.mrb[0].mxu0 %v301
    %v375 = vpop.f32.mrb[0].mxu0
    %v376 = vadd.f32 %v294, %v375
    %v377 = vpop.f32.mrb[0].mxu0
    %v378 = vadd.f32 %v294, %v377
    %379 = vdwg.mxu0
    %380 = vmatprep.subr.mxu0 %v273
    %381 = vmatpush1.msra.mxu0 %v272
    %382 = vmatprep.subr.mxu0 %v277
    %383 = vmatpush1.msra.mxu0 %v276
    %384 = vmatprep.subr.mxu0 %v281
    %385 = vmatpush1.msra.mxu0 %v280
    %386 = vmatprep.subr.mxu0 %v285
    %387 = vmatpush1.msra.mxu0 %v284
    %388 = vmatprep.subr.mxu0 0.0
    %389 = vmatpush1.msra.mxu0 0.0
    %390 = vmatprep.subr.mxu0 0.0
    %391 = vmatpush1.msra.mxu0 0.0
    %392 = vmatprep.subr.mxu0 0.0
    %393 = vmatpush1.msra.mxu0 0.0
    %394 = vmatprep.subr.mxu0 0.0
    %395 = vmatpush1.msra.mxu0 0.0
    %396 = vmatprep.subr.mxu0 0.0
    %397 = vmatpush1.msra.mxu0 0.0
    %398 = vmatprep.subr.mxu0 0.0
    %399 = vmatpush1.msra.mxu0 0.0
    %400 = vmatprep.subr.mxu0 0.0
    %401 = vmatpush1.msra.mxu0 0.0
    %402 = vmatprep.subr.mxu0 0.0
    %403 = vmatpush1.msra.mxu0 0.0
    %404 = vmatprep.subr.mxu0 0.0
    %405 = vmatpush1.msra.mxu0 0.0
    %406 = vmatprep.subr.mxu0 0.0
    %407 = vmatpush1.msra.mxu0 0.0
    %408 = vmatprep.subr.mxu0 0.0
    %409 = vmatpush1.msra.mxu0 0.0
    %410 = vmatprep.subr.mxu0 0.0
    %411 = vmatpush1.msra.mxu0 0.0
    %412 = vmatprep.subr.mxu0 0.0
    %413 = vmatpush1.msra.mxu0 0.0
    %414 = vmatprep.subr.mxu0 0.0
    %415 = vmatpush1.msra.mxu0 0.0
    %416 = vmatprep.subr.mxu0 0.0
    %417 = vmatpush1.msra.mxu0 0.0
    %418 = vmatprep.subr.mxu0 0.0
    %419 = vmatpush1.msra.mxu0 0.0
    %420 = vmatprep.subr.mxu0 0.0
    %421 = vmatpush1.msra.mxu0 0.0
    %422 = vmatprep.subr.mxu0 0.0
    %423 = vmatpush1.msra.mxu0 0.0
    %424 = vmatprep.subr.mxu0 0.0
    %425 = vmatpush1.msra.mxu0 0.0
    %426 = vmatprep.subr.mxu0 0.0
    %427 = vmatpush1.msra.mxu0 0.0
    %428 = vmatprep.subr.mxu0 0.0
    %429 = vmatpush1.msra.mxu0 0.0
    %430 = vmatprep.subr.mxu0 0.0
    %431 = vmatpush1.msra.mxu0 0.0
    %432 = vmatprep.subr.mxu0 0.0
    %433 = vmatpush1.msra.mxu0 0.0
    %434 = vmatprep.subr.mxu0 0.0
    %435 = vmatpush1.msra.mxu0 0.0
    %436 = vmatprep.subr.mxu0 0.0
    %437 = vmatpush1.msra.mxu0 0.0
    %438 = vmatprep.subr.mxu0 0.0
    %439 = vmatpush1.msra.mxu0 0.0
    %440 = vmatprep.subr.mxu0 0.0
    %441 = vmatpush1.msra.mxu0 0.0
    %442 = vmatprep.subr.mxu0 0.0
    %443 = vmatpush1.msra.mxu0 0.0
    %444 = vmatprep.mubr.f32.mxu0 0.0
    %445 = vmatmul.mubr.f32.gmra.mrb[0].mxu0 %v298
    %v446 = vpop.f32.mrb[0].mxu0
    %v447 = vadd.f32 %v289, %v446
    %v448 = vpop.f32.mrb[0].mxu0
    %v449 = vadd.f32 %v289, %v448
    %450 = vmatprep.mubr.f32.mxu0 0.0
    %451 = vmatmul.mubr.f32.gmra.mrb[0].mxu0 %v301
    %v452 = vpop.f32.mrb[0].mxu0
    %v453 = vadd.f32 %v294, %v452
    %v454 = vpop.f32.mrb[0].mxu0
    %v455 = vadd.f32 %v294, %v454
    %456 = vdwg.mxu0
    %v457 = vmax.f32 %v370, 0.0
    %v458 = vmax.f32 %v372, 0.0
    %v459 = vmax.f32 %v447, 0.0
    %v460 = vmax.f32 %v449, 0.0
    %v461 = vmax.f32 %v376, 0.0
    %v462 = vmax.f32 %v378, 0.0
    %v463 = vmax.f32 %v453, 0.0
    %v464 = vmax.f32 %v455, 0.0
    %466 = vset.pattern.permute.xlu0 0
    %467 = vperm.xlu0 %466, %v41
    %v468 = vpop.permute.xlu0 %467
    %471 = vset.pattern.permute.xlu0 0
    %472 = vperm.xlu0 %471, %v42
    %v473 = vpop.permute.xlu0 %472
    %v475 = vmul.f32 %v457, %v468
    %v476 = vmul.f32 %v458, %v468
    %v477 = vmul.f32 %v459, %v468
    %v478 = vmul.f32 %v460, %v468
    %v479 = vmul.f32 %v461, %v473
    %v480 = vmul.f32 %v462, %v473
    %v481 = vmul.f32 %v463, %v473
    %v482 = vmul.f32 %v464, %v473
    %v483 = vadd.f32 %v475, %v479
    %v484 = vrot.slane %v483, 4
    %v485 = vadd.f32 %v483, %v484
    %v486 = vrot.slane %v485, 2
    %v487 = vadd.f32 %v485, %v486
    %v488 = vrot.slane %v487, 1
    %v489 = vadd.f32 %v487, %v488
    %v490 = vadd.f32 %v476, %v480
    %v491 = vrot.slane %v490, 4
    %v492 = vadd.f32 %v490, %v491
    %v493 = vrot.slane %v492, 2
    %v494 = vadd.f32 %v492, %v493
    %v495 = vrot.slane %v494, 1
    %v496 = vadd.f32 %v494, %v495
    %v497 = vadd.f32 %v477, %v481
    %v498 = vrot.slane %v497, 4
    %v499 = vadd.f32 %v497, %v498
    %v500 = vrot.slane %v499, 2
    %v501 = vadd.f32 %v499, %v500
    %v502 = vrot.slane %v501, 1
    %v503 = vadd.f32 %v501, %v502
    %v504 = vadd.f32 %v478, %v482
    %v505 = vrot.slane %v504, 4
    %v506 = vadd.f32 %v504, %v505
    %v507 = vrot.slane %v506, 2
    %v508 = vadd.f32 %v506, %v507
    %v509 = vrot.slane %v508, 1
    %v510 = vadd.f32 %v508, %v509
    %512 = vset.pattern.permute.xlu0 0
    %513 = vperm.xlu0 %512, %v43
    %v514 = vpop.permute.xlu0 %513
    %v516 = vlaneseq
    %v517 = vshrl.u32 %v516, 7
    %v518 = vsub.s32 0, %v517
    %v519 = vrot.slane %v514, %v518
    %v520 = vadd.f32 %v489, %v519
    %v521 = vadd.f32 %v496, %v519
    %v522 = vadd.f32 %v503, %v519
    %v523 = vadd.f32 %v510, %v519
    %v528 = vcombine.low %v520, %v521
    %v529 = vcombine.low %v522, %v523
    %v531 = vunpack.c.l.s4 1966171168
    %v532 = vunpack.c.0.s8 %v531
    %v533 = vlaneseq
    %v534 = vshrl.u32 %v533, 7
    %v535 = vsub.s32 %v532, %v534
    %v536 = vrot.slane %v528, %v535
    %v538 = vunpack.c.l.s4 1966171168
    %v539 = vunpack.c.0.s8 %v538
    %v540 = vlaneseq
    %v541 = vshrl.u32 %v540, 7
    %v542 = vsub.s32 %v539, %v541
    %v543 = vrot.slane %v529, %v542
    %v544 = vcombine.low %v536, %v543
    %v546 = vunpack.c.l.s4 1966171168
    %v547 = vunpack.c.0.s8 %v546
    %v548 = vlaneseq
    %v549 = vshrl.u32 %v548, 7
    %v550 = vsub.s32 %v547, %v549
    %v551 = vrot.slane %v544, %v550
    %v553 = vlaneseq
    %vm554 = vcmp.ge.s32.totalorder %v553, 0
    %vm555 = vcmp.lt.s32.totalorder %v553, 512
    %vm556 = vmand %vm554, %vm555
    %557 = vst.msk [vmem:[#allocation3] sm:$0xf] %vm556, %v551
    // Predicated region
    $region30: #{tpu_custom_call.1} parent=1 // pred_check
      _
    $region31: #{tpu_custom_call.1} parent=1 // pred_check_branch
      %559 = sbr.rel (0) target = $region33
    $region32: #{tpu_custom_call.1} parent=1 // pred_region
      %s561 = ssub.s32 64, 64
      %562 = vsyncadd [#allocation4], %s561
      %s564 = sshll.u32 [#allocation3], 4
      %s565 = int_to_ptr.vmem [resolvable:$true] %s564
      %567 = dma.vmem_to_hbm [thread:$0]  %s565, 64, %s7, [#allocation4]
    $region33: #{tpu_custom_call.1} parent=1 // pred_fallthru
      _
    // Predicated region
    $region34: #{tpu_custom_call.1} parent=1 // pred_check
      _
    $region35: #{tpu_custom_call.1} parent=1 // pred_check_branch
      %569 = sbr.rel (0) target = $region37
    $region36: #{tpu_custom_call.1} parent=1 // pred_region
      %570 = dma.done [#allocation4], 64
    $region37: #{tpu_custom_call.1} parent=1 // pred_fallthru
      _
    %571 = vsyncpa [#allocation4], 1

</llo_original>
